<compile_context>
chip_gen: v6e
topology: v6e:2x2x1
jax: 0.10.0
libtpu: 0.0.40
codegen_flags: <defaults>
</compile_context>

<pallas_src>
import functools

import jax
import jax.numpy as jnp
from jax import lax
from jax.experimental import pallas as pl
from jax.experimental.pallas import tpu as pltpu

EPS = 1e-12  # matches torch.nn.functional.normalize default eps


def _prediction_kernel(n_per_set, w_ref, x_ref, *out_refs):
    # w_ref: (total_N, C)  pre-L2-normalized cluster rows (grid-invariant)
    # x_ref: (C, t_hw)     raw NCHW feature tile for one batch element
    # out_refs: n_sets refs of shape (n_per_set, t_hw)
    x = x_ref[...]
    xf = x.astype(jnp.float32)

    # F.normalize(x, dim=1) commutes with the column-independent matmul:
    # (W @ x) * rsqrt(max(sumsq, eps^2)) == W @ (x / max(||x||, eps))
    sumsq = jnp.sum(xf * xf, axis=0, keepdims=True)            # (1, t_hw) f32
    inv_norm = lax.rsqrt(jnp.maximum(sumsq, EPS * EPS))        # EUP slot

    res = jnp.dot(w_ref[...], x, preferred_element_type=jnp.float32)
    res = res * inv_norm                                       # (total_N, t_hw)

    for s, o_ref in enumerate(out_refs):
        o_ref[...] = res[s * n_per_set:(s + 1) * n_per_set, :].astype(o_ref.dtype)


@functools.partial(jax.jit, static_argnames=("n_per_set", "n_sets", "t_hw"))
def _prediction_scores(clusters_norm, x_flat, *, n_per_set, n_sets, t_hw):
    """clusters_norm: (n_sets*n_per_set, C); x_flat: (B, C, HW)."""
    B, C, HW = x_flat.shape
    total_N, Cw = clusters_norm.shape
    assert C == Cw
    assert total_N == n_sets * n_per_set

    num_tiles = pl.cdiv(HW, t_hw)

    out_shape = tuple(
        jax.ShapeDtypeStruct((B, n_per_set, HW), x_flat.dtype)
        for _ in range(n_sets))
    out_specs = tuple(
        pl.BlockSpec((None, n_per_set, t_hw), lambda b, j: (b, 0, j))
        for _ in range(n_sets))

    itemsize = jnp.dtype(x_flat.dtype).itemsize
    cost = pl.CostEstimate(
        flops=2 * B * total_N * C * HW,
        transcendentals=B * HW,
        bytes_accessed=(B * C * HW * itemsize
                        + total_N * C * itemsize
                        + n_sets * B * n_per_set * HW * itemsize))

    return pl.pallas_call(
        functools.partial(_prediction_kernel, n_per_set),
        out_shape=out_shape,
        grid_spec=pltpu.PrefetchScalarGridSpec(
            num_scalar_prefetch=0,
            grid=(B, num_tiles),
            in_specs=[
                # tiny invariant weight block (total_N x C)
                pl.BlockSpec((total_N, C), lambda b, j: (0, 0)),
                # one (C, t_hw) slab of x per grid step, batch dim squeezed
                pl.BlockSpec((None, C, t_hw), lambda b, j: (b, 0, j)),
            ],
            out_specs=out_specs,
        ),
        compiler_params=pltpu.CompilerParams(
            dimension_semantics=("parallel", "parallel")),
        cost_estimate=cost,
    )(clusters_norm, x_flat)


def _round_up(n, m):
    return (n + m - 1) // m * m


def _pick_t_hw(hw, batch, cap=8192):
    """HW tile: big (amortize step overhead), lane-friendly, no HBM padding."""
    if hw > cap:
        return cap                                  # multiple of 128, ragged tail masked
    if batch == 1 and hw > 256:
        # keep >= 2 grid steps so both v7x TensorCores get work
        return _round_up(-(-hw // 2), 128)          # multiple of 128
    return hw                                       # single tile == full dim (always legal)


class PredictionPallas:
    """JAX/Pallas port of the PyTorch `Prediction` module (forward only)."""

    def __init__(self, key, dim, n_classes, alpha=0.99, n_teachers=2):
        self.dim = dim
        self.n_classes = n_classes
        self.alpha = alpha
        self.n_teachers = n_teachers

        # xavier_normal_ std for a (n_classes, dim) matrix
        std = (2.0 / (n_classes + dim)) ** 0.5
        keys = jax.random.split(key, 1 + n_teachers)

        local = std * jax.random.normal(keys[0], (n_classes, dim), jnp.float32)
        # init_global_clusters(): local is normalized in-place, global is a copy
        local = local / jnp.maximum(
            jnp.sqrt(jnp.sum(local * local, axis=1, keepdims=True)), EPS)
        self.local_clusters = local
        self.global_clusters = local  # functionally a clone for forward

        self.teacher_clusters = [
            std * jax.random.normal(keys[1 + t], (n_classes, dim), jnp.float32)
            for t in range(n_teachers)
        ]
        # TODO(synk): `sigma` parameter and EMA update_global_clusters() are not
        # part of forward(); not materialized here.

    def __call__(self, x):
        # x: (B, C, H, W) float32 or bfloat16 NCHW, like the PyTorch reference.
        B, C, H, W = x.shape
        assert C == self.dim
        hw = H * W
        x_flat = x.reshape(B, C, hw)            # metadata-only reshape, no pad

        t_hw = _pick_t_hw(hw, B)

        # Stack all cluster sets and L2-normalize ONCE (hoisted out of the grid).
        clusters = jnp.concatenate(
            [self.local_clusters, self.global_clusters] + self.teacher_clusters,
            axis=0)                              # (n_sets * N, C)
        clusters_norm = clusters * lax.rsqrt(
            jnp.maximum(jnp.sum(clusters * clusters, axis=1, keepdims=True),
                        EPS * EPS))
        clusters_norm = clusters_norm.astype(x.dtype)   # MXU consumes x dtype

        n_sets = 2 + self.n_teachers
        outs = _prediction_scores(clusters_norm, x_flat,
                                  n_per_set=self.n_classes,
                                  n_sets=n_sets, t_hw=t_hw)
        outs = [o.reshape(B, self.n_classes, H, W) for o in outs]
        inner_products_local = outs[0]
        inner_products_global = outs[1]
        teacher_scores = outs[2:]
        return inner_products_local, inner_products_global, teacher_scores


def _reference(x, module):
    """Pure-JAX reference of the PyTorch forward, for a sanity check."""
    def norm_rows(a, axis):
        return a / jnp.maximum(
            jnp.sqrt(jnp.sum(a * a, axis=axis, keepdims=True)), EPS)

    xf = norm_rows(x.astype(jnp.float32), 1)
    loc = norm_rows(module.local_clusters, 1)
    glo = norm_rows(module.global_clusters, 1)
    out_l = jnp.einsum('bchw,nc->bnhw', xf, loc)
    out_g = jnp.einsum('bchw,nc->bnhw', xf, glo)
    outs_t = [jnp.einsum('bchw,nc->bnhw', xf, norm_rows(t, 1))
              for t in module.teacher_clusters]
    return out_l, out_g, outs_t


def _check(module, x, B, H, W, n_classes, n_teachers, atol):
    out_l, out_g, out_t = module(x)
    jax.block_until_ready((out_l, out_g, out_t))
    ref_l, ref_g, ref_t = _reference(x, module)
    assert out_l.shape == (B, n_classes, H, W)
    assert out_g.shape == (B, n_classes, H, W)
    assert len(out_t) == n_teachers
    assert jnp.allclose(out_l, ref_l, atol=atol)
    assert jnp.allclose(out_g, ref_g, atol=atol)
    for a, b in zip(out_t, ref_t):
        assert a.shape == (B, n_classes, H, W)
        assert jnp.allclose(a, b, atol=atol)


if __name__ == "__main__":
    key = jax.random.PRNGKey(0)
    k_param, k_x1, k_x2 = jax.random.split(key, 3)

    C = 32          # cfg.dim
    n_classes = 8
    n_teachers = 2
    module = PredictionPallas(k_param, dim=C, n_classes=n_classes,
                              alpha=0.99, n_teachers=n_teachers)

    # 1) standard case: single full-HW tile per batch element
    B, H, W = 2, 16, 16
    x = jax.random.normal(k_x1, (B, C, H, W), jnp.float32)
    _check(module, x, B, H, W, n_classes, n_teachers, atol=1e-4)

    # 2) ragged case: B==1, hw=500 -> two 256-wide tiles, masked tail columns
    B2, H2, W2 = 1, 25, 20
    x2 = jax.random.normal(k_x2, (B2, C, H2, W2), jnp.float32)
    _check(module, x2, B2, H2, W2, n_classes, n_teachers, atol=1e-4)

    print("KERNEL_OK")
</pallas_src>

<mosaic_0001>
module attributes {stable_mosaic.version = 11 : i64} {
  func.func @_prediction_kernel(%arg0: i32, %arg1: i32, %arg2: memref<32x32xf32, #tpu.memory_space<vmem>>, %arg3: memref<1x32x256xf32, #tpu.memory_space<vmem>>, %arg4: memref<1x8x256xf32, #tpu.memory_space<vmem>>, %arg5: memref<1x8x256xf32, #tpu.memory_space<vmem>>, %arg6: memref<1x8x256xf32, #tpu.memory_space<vmem>>, %arg7: memref<1x8x256xf32, #tpu.memory_space<vmem>>) attributes {dimension_semantics = [#tpu.dimension_semantics<parallel>, #tpu.dimension_semantics<parallel>], iteration_bounds = array<i64: 2, 1>, scalar_prefetch = 0 : i64, scratch_operands = 0 : i64, tpu.core_type = #tpu.core_type<tc>, window_params = [{pipeline_mode = #tpu.pipeline_mode<synchronous>, transform_indices = @transform_0, window_bounds = array<i64: 32, 32>}, {transform_indices = @transform_1, window_bounds = array<i64: 1, 32, 256>}, {transform_indices = @transform_2, window_bounds = array<i64: 1, 8, 256>}, {transform_indices = @transform_3, window_bounds = array<i64: 1, 8, 256>}, {transform_indices = @transform_4, window_bounds = array<i64: 1, 8, 256>}, {transform_indices = @transform_5, window_bounds = array<i64: 1, 8, 256>}]} {
    %c0 = arith.constant 0 : index
    %c0_0 = arith.constant 0 : index
    %c0_1 = arith.constant 0 : index
    %0 = vector.load %arg3[%c0, %c0_0, %c0_1] : memref<1x32x256xf32, #tpu.memory_space<vmem>>, vector<1x32x256xf32>
    %1 = vector.shape_cast %0 : vector<1x32x256xf32> to vector<32x256xf32>
    %2 = arith.mulf %1, %1 : vector<32x256xf32>
    %cst = arith.constant dense<0.000000e+00> : vector<256xf32>
    %3 = vector.multi_reduction <add>, %2, %cst [0] : vector<32x256xf32> to vector<256xf32>
    %4 = vector.shape_cast %3 : vector<256xf32> to vector<1x256xf32>
    %cst_2 = arith.constant 1.000000e-24 : f32
    %5 = vector.broadcast %cst_2 : f32 to vector<1x256xf32>
    %6 = arith.maximumf %4, %5 : vector<1x256xf32>
    %7 = math.rsqrt %6 : vector<1x256xf32>
    %c0_3 = arith.constant 0 : index
    %c0_4 = arith.constant 0 : index
    %8 = vector.load %arg2[%c0_3, %c0_4] : memref<32x32xf32, #tpu.memory_space<vmem>>, vector<32x32xf32>
    %cst_5 = arith.constant dense<0.000000e+00> : vector<32x256xf32>
    %9 = tpu.matmul %8, %1, %cst_5 {dimension_numbers = #tpu.dot_dimension_numbers<[1], [0], [0], [1], [0, 0, 1, 1], [], []>} : vector<32x32xf32>, vector<32x256xf32>, vector<32x256xf32> -> vector<32x256xf32>
    %10 = vector.broadcast %7 : vector<1x256xf32> to vector<32x256xf32>
    %11 = arith.mulf %9, %10 : vector<32x256xf32>
    %12 = vector.extract_strided_slice %11 {offsets = [0, 0], sizes = [8, 256], strides = [1, 1]} : vector<32x256xf32> to vector<8x256xf32>
    %c0_6 = arith.constant 0 : index
    %c0_7 = arith.constant 0 : index
    %c0_8 = arith.constant 0 : index
    %13 = vector.load %arg4[%c0_6, %c0_7, %c0_8] : memref<1x8x256xf32, #tpu.memory_space<vmem>>, vector<1x8x256xf32>
    %14 = vector.shape_cast %13 : vector<1x8x256xf32> to vector<8x256xf32>
    %15 = vector.shape_cast %12 : vector<8x256xf32> to vector<1x8x256xf32>
    tpu.vector_store %arg4[%c0_6, %c0_7, %c0_8], %15 {strides = array<i32>} : memref<1x8x256xf32, #tpu.memory_space<vmem>>, vector<1x8x256xf32>,
    %16 = vector.extract_strided_slice %11 {offsets = [8, 0], sizes = [8, 256], strides = [1, 1]} : vector<32x256xf32> to vector<8x256xf32>
    %c0_9 = arith.constant 0 : index
    %c0_10 = arith.constant 0 : index
    %c0_11 = arith.constant 0 : index
    %17 = vector.load %arg5[%c0_9, %c0_10, %c0_11] : memref<1x8x256xf32, #tpu.memory_space<vmem>>, vector<1x8x256xf32>
    %18 = vector.shape_cast %17 : vector<1x8x256xf32> to vector<8x256xf32>
    %19 = vector.shape_cast %16 : vector<8x256xf32> to vector<1x8x256xf32>
    tpu.vector_store %arg5[%c0_9, %c0_10, %c0_11], %19 {strides = array<i32>} : memref<1x8x256xf32, #tpu.memory_space<vmem>>, vector<1x8x256xf32>,
    %20 = vector.extract_strided_slice %11 {offsets = [16, 0], sizes = [8, 256], strides = [1, 1]} : vector<32x256xf32> to vector<8x256xf32>
    %c0_12 = arith.constant 0 : index
    %c0_13 = arith.constant 0 : index
    %c0_14 = arith.constant 0 : index
    %21 = vector.load %arg6[%c0_12, %c0_13, %c0_14] : memref<1x8x256xf32, #tpu.memory_space<vmem>>, vector<1x8x256xf32>
    %22 = vector.shape_cast %21 : vector<1x8x256xf32> to vector<8x256xf32>
    %23 = vector.shape_cast %20 : vector<8x256xf32> to vector<1x8x256xf32>
    tpu.vector_store %arg6[%c0_12, %c0_13, %c0_14], %23 {strides = array<i32>} : memref<1x8x256xf32, #tpu.memory_space<vmem>>, vector<1x8x256xf32>,
    %24 = vector.extract_strided_slice %11 {offsets = [24, 0], sizes = [8, 256], strides = [1, 1]} : vector<32x256xf32> to vector<8x256xf32>
    %c0_15 = arith.constant 0 : index
    %c0_16 = arith.constant 0 : index
    %c0_17 = arith.constant 0 : index
    %25 = vector.load %arg7[%c0_15, %c0_16, %c0_17] : memref<1x8x256xf32, #tpu.memory_space<vmem>>, vector<1x8x256xf32>
    %26 = vector.shape_cast %25 : vector<1x8x256xf32> to vector<8x256xf32>
    %27 = vector.shape_cast %24 : vector<8x256xf32> to vector<1x8x256xf32>
    tpu.vector_store %arg7[%c0_15, %c0_16, %c0_17], %27 {strides = array<i32>} : memref<1x8x256xf32, #tpu.memory_space<vmem>>, vector<1x8x256xf32>,
    return
  }
  func.func @transform_0(%arg0: i32, %arg1: i32) -> (i32, i32) {
    %c0_i32 = arith.constant 0 : i32
    %c0_i32_0 = arith.constant 0 : i32
    %c0_i32_1 = arith.constant 0 : i32
    return %c0_i32, %c0_i32_0 : i32, i32
  }
  func.func @transform_1(%arg0: i32, %arg1: i32) -> (i32, i32, i32) {
    %c0_i32 = arith.constant 0 : i32
    %c0_i32_0 = arith.constant 0 : i32
    return %arg0, %c0_i32, %arg1 : i32, i32, i32
  }
  func.func @transform_2(%arg0: i32, %arg1: i32) -> (i32, i32, i32) {
    %c0_i32 = arith.constant 0 : i32
    %c0_i32_0 = arith.constant 0 : i32
    return %arg0, %c0_i32, %arg1 : i32, i32, i32
  }
  func.func @transform_3(%arg0: i32, %arg1: i32) -> (i32, i32, i32) {
    %c0_i32 = arith.constant 0 : i32
    %c0_i32_0 = arith.constant 0 : i32
    return %arg0, %c0_i32, %arg1 : i32, i32, i32
  }
  func.func @transform_4(%arg0: i32, %arg1: i32) -> (i32, i32, i32) {
    %c0_i32 = arith.constant 0 : i32
    %c0_i32_0 = arith.constant 0 : i32
    return %arg0, %c0_i32, %arg1 : i32, i32, i32
  }
  func.func @transform_5(%arg0: i32, %arg1: i32) -> (i32, i32, i32) {
    %c0_i32 = arith.constant 0 : i32
    %c0_i32_0 = arith.constant 0 : i32
    return %arg0, %c0_i32, %arg1 : i32, i32, i32
  }
}

</mosaic_0001>

<llo_original>
// kernel: _prediction_scores.1
$region0: #{_prediction_scores.1}
  #allocation0 [shape = 'u32[]', space=smem, size = 0x4, offset = 0x4, fixed_abs, tag = 'smem constant byte address 0x4 - core index']
  #allocation1 [shape = 'u32[144,128]{1,0:T(1,128)}', space=vmem, size = 0x12000, scoped, tag = 'internal scratch']
  %s0 = inlined_call_operand.hbm [shape: f32[32,32], index: 0, kind: input, shape index: {}]
  %s1 = inlined_call_operand.hbm [shape: f32[2,32,256], index: 1, kind: input, shape index: {}]
  %s2 = inlined_call_operand.hbm [shape: f32[2,8,256], index: 2, kind: output, shape index: {0}]
  %s3 = inlined_call_operand.hbm [shape: f32[2,8,256], index: 3, kind: output, shape index: {1}]
  %s4 = inlined_call_operand.hbm [shape: f32[2,8,256], index: 4, kind: output, shape index: {2}]
  %s5 = inlined_call_operand.hbm [shape: f32[2,8,256], index: 5, kind: output, shape index: {3}]
  %6 = xla_tuple %s2, %s3, %s4, %s5
  %s7 = sld [smem:[#allocation0]]
  $region73: #{_prediction_scores.1} parent=0
    _
  %s9 = ssub.s32 1, %s7
  %s10 = scalar_select 0, %s9, %s7
  $region1: #{_prediction_scores.1} parent=0
    #allocation2 [shape = 'u8[16384]{0}', space=vmem, size = 0x4000, scoped, tag = 'input window, operand 0, single buffered']
    #allocation3 [shape = 's32[2]{0}', space=sflag, size = 0x8, scoped, tag = 'scoped memory for _prediction_scores.1']
    #allocation4 [shape = 's32[2]{0}', space=sflag, size = 0x8, scoped, tag = 'scoped memory for _prediction_scores.1']
    #allocation5 [shape = 'u8[65536]{0}', space=vmem, size = 0x10000, scoped, tag = 'input window, operand 1']
    #allocation6 [shape = 's32[2]{0}', space=sflag, size = 0x8, scoped, tag = 'scoped memory for _prediction_scores.1']
    #allocation7 [shape = 'u8[16384]{0}', space=vmem, size = 0x4000, scoped, tag = 'output window, operand 0']
    #allocation8 [shape = 'u8[16384]{0}', space=vmem, size = 0x4000, scoped, tag = 'output window, operand 1']
    #allocation9 [shape = 's32[2]{0}', space=sflag, size = 0x8, scoped, tag = 'scoped memory for _prediction_scores.1']
    #allocation10 [shape = 'u8[16384]{0}', space=vmem, size = 0x4000, scoped, tag = 'output window, operand 2']
    #allocation11 [shape = 'u8[16384]{0}', space=vmem, size = 0x4000, scoped, tag = 'output window, operand 3']
    #allocation12 [shape = 's32[2]{0}', space=sflag, size = 0x8, scoped, tag = 'scoped memory for _prediction_scores.1']
    %11 = vsyncpa [#allocation3], 0
    %12 = vsyncpa [#allocation6], 0
    %s13 = scalar_lea.sflag [#allocation6], 1
    %14 = vsyncpa %s13, 0
    %15 = vsyncpa [#allocation4], 0
    %s16 = scalar_lea.sflag [#allocation4], 1
    %17 = vsyncpa %s16, 0
    %18 = vsyncpa [#allocation9], 0
    %s19 = scalar_lea.sflag [#allocation9], 1
    %20 = vsyncpa %s19, 0
    %21 = vsyncpa [#allocation12], 0
    %s22 = scalar_lea.sflag [#allocation12], 1
    %23 = vsyncpa %s22, 0
    loop: start=0, step=1, limit=4
    $region2: #{_prediction_scores.1} parent=1 // loop_pre_header
      _
    $region3: #{_prediction_scores.1} parent=1 // loop_header
      %s25 = sphi 0, %s29
      %p26 = scmp.ge.s32.totalorder %s25, 4
      %s32 = sphi 0, %s44
      %s33 = sphi 0, %s40
      %s34 = sphi 0, %s32
      %s35 = sphi 0, %s33
      %s36 = sphi 0, %s34
      %s37 = sphi 0, %s35
      %s45 = sphi 0, %s45
      %s47 = sphi 0, %s45
      %s48 = sphi 0, %s47
      %s62 = sphi 0, %s48
      %s70 = sphi 0, %s72
      %s73 = sphi 0, %s70
      %s74 = sphi 0, %s73
      %s90 = sphi 0, %s74
      %s98 = sphi 0, %s100
      %s101 = sphi 0, %s98
      %s102 = sphi 0, %s101
      %s118 = sphi 0, %s102
      %s126 = sphi 0, %s128
      %s129 = sphi 0, %s126
      %s130 = sphi 0, %s129
      %s146 = sphi 0, %s130
      %s154 = sphi 0, %s156
      %s157 = sphi 0, %s154
      %s158 = sphi 0, %s157
      %s174 = sphi 0, %s158
      %s182 = sphi 0, %s184
      %s185 = sphi 0, %s182
      %s186 = sphi 0, %s185
      %s202 = sphi 0, %s186
    $region4: #{_prediction_scores.1} parent=1 // loop_header_branch
      %28 = sbr.rel (%p26) target = $region8
    $region5: #{_prediction_scores.1} parent=1 // loop_body
      %s30 = ssub.s32 %s25, 1
      %s31 = ssub.s32 %s25, 2
      %s38 = sadd.s32 1, %s33
      %p39 = scmp.ge.s32.totalorder %s38, 1
      %s40 = scalar_select %p39, 0, %s38
      %s41 = sadd.s32 1, %s32
      %s42 = scalar_select %p39, %s41, %s32
      %p43 = scmp.ge.s32.totalorder %s42, 2
      %s44 = scalar_select %p43, 0, %s42
      %s46 = sadd.s32 %s45, 1
      %p49 = scmp.eq.s32.totalorder %s25, 1
      %p50 = scmp.ne.s32.totalorder %s45, %s47
      %p51 = scmp.eq.s32.totalorder %s25, 0
      %p52 = por %p50, %p51
      %p53 = scmp.ne.s32.totalorder %s45, %s47
      %p54 = scmp.eq.s32.totalorder %s30, 1
      %p55 = por %p53, %p54
      %p56 = scmp.ne.s32.totalorder %s47, %s48
      %p57 = scmp.eq.s32.totalorder %s30, 0
      %p58 = por %p56, %p57
      %p59 = scmp.ne.s32.totalorder %s47, %s48
      %p60 = scmp.eq.s32.totalorder %s31, 1
      %p61 = por %p59, %p60
      %p63 = scmp.ne.s32.totalorder %s48, %s62
      %p64 = scmp.eq.s32.totalorder %s31, 0
      %p65 = por %p63, %p64
      %s66 = ssub.s32 %s32, %s44
      %s67 = ssub.s32 %s33, %s40
      %s68 = sor.u32 %s66, %s67
      %p69 = scmp.eq.s32.totalorder %s68, 0
      %s71 = sadd.s32 %s70, 1
      %s72 = scalar_select %p69, %s70, %s71
      %p75 = pneg %p69
      %p76 = scmp.eq.s32.totalorder %s25, 1
      %p77 = por %p75, %p76
      %p78 = scmp.ne.s32.totalorder %s70, %s73
      %p79 = scmp.eq.s32.totalorder %s25, 0
      %p80 = por %p78, %p79
      %p81 = scmp.ne.s32.totalorder %s70, %s73
      %p82 = scmp.eq.s32.totalorder %s30, 1
      %p83 = por %p81, %p82
      %p84 = scmp.ne.s32.totalorder %s73, %s74
      %p85 = scmp.eq.s32.totalorder %s30, 0
      %p86 = por %p84, %p85
      %p87 = scmp.ne.s32.totalorder %s73, %s74
      %p88 = scmp.eq.s32.totalorder %s31, 1
      %p89 = por %p87, %p88
      %p91 = scmp.ne.s32.totalorder %s74, %s90
      %p92 = scmp.eq.s32.totalorder %s31, 0
      %p93 = por %p91, %p92
      %s94 = ssub.s32 %s32, %s44
      %s95 = ssub.s32 %s33, %s40
      %s96 = sor.u32 %s94, %s95
      %p97 = scmp.eq.s32.totalorder %s96, 0
      %s99 = sadd.s32 %s98, 1
      %s100 = scalar_select %p97, %s98, %s99
      %p103 = pneg %p97
      %p104 = scmp.eq.s32.totalorder %s25, 1
      %p105 = por %p103, %p104
      %p106 = scmp.ne.s32.totalorder %s98, %s101
      %p107 = scmp.eq.s32.totalorder %s25, 0
      %p108 = por %p106, %p107
      %p109 = scmp.ne.s32.totalorder %s98, %s101
      %p110 = scmp.eq.s32.totalorder %s30, 1
      %p111 = por %p109, %p110
      %p112 = scmp.ne.s32.totalorder %s101, %s102
      %p113 = scmp.eq.s32.totalorder %s30, 0
      %p114 = por %p112, %p113
      %p115 = scmp.ne.s32.totalorder %s101, %s102
      %p116 = scmp.eq.s32.totalorder %s31, 1
      %p117 = por %p115, %p116
      %p119 = scmp.ne.s32.totalorder %s102, %s118
      %p120 = scmp.eq.s32.totalorder %s31, 0
      %p121 = por %p119, %p120
      %s122 = ssub.s32 %s32, %s44
      %s123 = ssub.s32 %s33, %s40
      %s124 = sor.u32 %s122, %s123
      %p125 = scmp.eq.s32.totalorder %s124, 0
      %s127 = sadd.s32 %s126, 1
      %s128 = scalar_select %p125, %s126, %s127
      %p131 = pneg %p125
      %p132 = scmp.eq.s32.totalorder %s25, 1
      %p133 = por %p131, %p132
      %p134 = scmp.ne.s32.totalorder %s126, %s129
      %p135 = scmp.eq.s32.totalorder %s25, 0
      %p136 = por %p134, %p135
      %p137 = scmp.ne.s32.totalorder %s126, %s129
      %p138 = scmp.eq.s32.totalorder %s30, 1
      %p139 = por %p137, %p138
      %p140 = scmp.ne.s32.totalorder %s129, %s130
      %p141 = scmp.eq.s32.totalorder %s30, 0
      %p142 = por %p140, %p141
      %p143 = scmp.ne.s32.totalorder %s129, %s130
      %p144 = scmp.eq.s32.totalorder %s31, 1
      %p145 = por %p143, %p144
      %p147 = scmp.ne.s32.totalorder %s130, %s146
      %p148 = scmp.eq.s32.totalorder %s31, 0
      %p149 = por %p147, %p148
      %s150 = ssub.s32 %s32, %s44
      %s151 = ssub.s32 %s33, %s40
      %s152 = sor.u32 %s150, %s151
      %p153 = scmp.eq.s32.totalorder %s152, 0
      %s155 = sadd.s32 %s154, 1
      %s156 = scalar_select %p153, %s154, %s155
      %p159 = pneg %p153
      %p160 = scmp.eq.s32.totalorder %s25, 1
      %p161 = por %p159, %p160
      %p162 = scmp.ne.s32.totalorder %s154, %s157
      %p163 = scmp.eq.s32.totalorder %s25, 0
      %p164 = por %p162, %p163
      %p165 = scmp.ne.s32.totalorder %s154, %s157
      %p166 = scmp.eq.s32.totalorder %s30, 1
      %p167 = por %p165, %p166
      %p168 = scmp.ne.s32.totalorder %s157, %s158
      %p169 = scmp.eq.s32.totalorder %s30, 0
      %p170 = por %p168, %p169
      %p171 = scmp.ne.s32.totalorder %s157, %s158
      %p172 = scmp.eq.s32.totalorder %s31, 1
      %p173 = por %p171, %p172
      %p175 = scmp.ne.s32.totalorder %s158, %s174
      %p176 = scmp.eq.s32.totalorder %s31, 0
      %p177 = por %p175, %p176
      %s178 = ssub.s32 %s32, %s44
      %s179 = ssub.s32 %s33, %s40
      %s180 = sor.u32 %s178, %s179
      %p181 = scmp.eq.s32.totalorder %s180, 0
      %s183 = sadd.s32 %s182, 1
      %s184 = scalar_select %p181, %s182, %s183
      %p187 = pneg %p181
      %p188 = scmp.eq.s32.totalorder %s25, 1
      %p189 = por %p187, %p188
      %p190 = scmp.ne.s32.totalorder %s182, %s185
      %p191 = scmp.eq.s32.totalorder %s25, 0
      %p192 = por %p190, %p191
      %p193 = scmp.ne.s32.totalorder %s182, %s185
      %p194 = scmp.eq.s32.totalorder %s30, 1
      %p195 = por %p193, %p194
      %p196 = scmp.ne.s32.totalorder %s185, %s186
      %p197 = scmp.eq.s32.totalorder %s30, 0
      %p198 = por %p196, %p197
      %p199 = scmp.ne.s32.totalorder %s185, %s186
      %p200 = scmp.eq.s32.totalorder %s31, 1
      %p201 = por %p199, %p200
      %p203 = scmp.ne.s32.totalorder %s186, %s202
      %p204 = scmp.eq.s32.totalorder %s31, 0
      %p205 = por %p203, %p204
      %p206 = scmp.le.s32.totalorder 1, %s25
      %p207 = scmp.lt.s32.totalorder %s25, 3
      %p208 = pnand %p206, %p207
      %p209 = pneg %p208
      // Predicated region
      $region9: #{_prediction_scores.1} parent=5 // pred_check
        _
      $region10: #{_prediction_scores.1} parent=5 // pred_check_branch
        %211 = sbr.rel (%p208) target = $region12
      $region11: #{_prediction_scores.1} parent=5 // pred_region
        %s212 = ssub.s32 %s25, 1
        // Predicated region
        $region13: #{_prediction_scores.1} parent=11 // pred_check
          %p213 = pneg %p58
        $region14: #{_prediction_scores.1} parent=11 // pred_check_branch
          %215 = sbr.rel (%p213) target = $region16
        $region15: #{_prediction_scores.1} parent=11 // pred_region
          %s217 = ssub.s32 512, 512
          %218 = vsyncadd [#allocation3], %s217
          %s219 = sshll.u32 [#allocation2], 4
          %s220 = int_to_ptr.vmem [resolvable:$true] %s219
          %225 = dma.hbm_to_vmem [thread:$0]  %s0, 512, %s220, [#allocation3], 128, 128, 8
        $region16: #{_prediction_scores.1} parent=11 // pred_fallthru
          _
      $region12: #{_prediction_scores.1} parent=5 // pred_fallthru
        _
      %p226 = scmp.lt.s32.totalorder %s25, 2
      // Predicated region
      $region17: #{_prediction_scores.1} parent=5 // pred_check
        %p227 = pneg %p226
      $region18: #{_prediction_scores.1} parent=5 // pred_check_branch
        %229 = sbr.rel (%p227) target = $region20
      $region19: #{_prediction_scores.1} parent=5 // pred_region
        // Predicated region
        $region21: #{_prediction_scores.1} parent=19 // pred_check
          %p230 = pneg %p80
        $region22: #{_prediction_scores.1} parent=19 // pred_check_branch
          %232 = sbr.rel (%p230) target = $region24
        $region23: #{_prediction_scores.1} parent=19 // pred_region
          %s233 = sand.u32 %s70, 1
          %s234 = scalar_lea.sflag [#allocation6], %s233
          %s235 = sand.u32 %s70, 1
          %s236 = smul.addr %s235, 64
          %s237 = scalar_lea.vmem [#allocation5], %s236
          %s238 = smul.u32 2, %s33
          %s240 = ssub.s32 1024, 1024
          %241 = vsyncadd %s234, %s240
          %s242 = smul.addr %s32, 8
          %s243 = sadd.s32 %s238, %s242
          %s244 = smul.addr %s243, 128
          %s245 = scalar_lea.hbm %s1, %s244
          %s246 = sshll.u32 %s237, 4
          %s247 = int_to_ptr.vmem [resolvable:$true] %s246
          %252 = dma.hbm_to_vmem [thread:$0]  %s245, 1024, %s247, %s234, 256, 256, 16
        $region24: #{_prediction_scores.1} parent=19 // pred_fallthru
          _
      $region20: #{_prediction_scores.1} parent=5 // pred_fallthru
        _
      %p253 = scmp.le.s32.totalorder 1, %s25
      %p254 = scmp.lt.s32.totalorder %s25, 3
      %p255 = pnand %p253, %p254
      %p256 = pneg %p255
      // Predicated region
      $region25: #{_prediction_scores.1} parent=5 // pred_check
        _
      $region26: #{_prediction_scores.1} parent=5 // pred_check_branch
        %258 = sbr.rel (%p255) target = $region28
      $region27: #{_prediction_scores.1} parent=5 // pred_region
        %s259 = ssub.s32 %s25, 1
        // Predicated region
        $region29: #{_prediction_scores.1} parent=27 // pred_check
          %p260 = pneg %p58
        $region30: #{_prediction_scores.1} parent=27 // pred_check_branch
          %262 = sbr.rel (%p260) target = $region32
        $region31: #{_prediction_scores.1} parent=27 // pred_region
          %263 = dma.done [#allocation3], 512
        $region32: #{_prediction_scores.1} parent=27 // pred_fallthru
          _
        %s264 = sand.u32 %s73, 1
        %s265 = scalar_lea.sflag [#allocation6], %s264
        %s266 = sand.u32 %s73, 1
        %s267 = smul.addr %s266, 64
        %s268 = scalar_lea.vmem [#allocation5], %s267
        // Predicated region
        $region33: #{_prediction_scores.1} parent=27 // pred_check
          %p269 = pneg %p86
        $region34: #{_prediction_scores.1} parent=27 // pred_check_branch
          %271 = sbr.rel (%p269) target = $region36
        $region35: #{_prediction_scores.1} parent=27 // pred_region
          %272 = dma.done %s265, 1024
        $region36: #{_prediction_scores.1} parent=27 // pred_fallthru
          _
        %p273 = pneg %p58
        %p274 = pneg %p55
        %s275 = sand.u32 %s73, 1
        %s276 = scalar_lea.sflag [#allocation6], %s275
        %s277 = sand.u32 %s73, 1
        %s278 = smul.addr %s277, 64
        %s279 = scalar_lea.vmem [#allocation5], %s278
        %p280 = pneg %p86
        %p281 = pneg %p83
        %p282 = pneg %p114
        %p283 = pneg %p111
        %s284 = sand.u32 %s101, 1
        %s285 = scalar_lea.sflag [#allocation4], %s284
        %s286 = sand.u32 %s101, 1
        %s287 = smul.addr %s286, 16
        %s288 = scalar_lea.vmem [#allocation7], %s287
        %p289 = pneg %p142
        %p290 = pneg %p139
        %s291 = sand.u32 %s30, 1
        %s292 = scalar_lea.sflag [#allocation9], %s291
        %s293 = sand.u32 %s129, 1
        %s294 = smul.addr %s293, 16
        %s295 = scalar_lea.vmem [#allocation8], %s294
        %p296 = pneg %p170
        %p297 = pneg %p167
        %s298 = sand.u32 %s30, 1
        %s299 = scalar_lea.sflag [#allocation9], %s298
        %s300 = sand.u32 %s157, 1
        %s301 = smul.addr %s300, 16
        %s302 = scalar_lea.vmem [#allocation10], %s301
        %p303 = pneg %p198
        %p304 = pneg %p195
        %s305 = sand.u32 %s185, 1
        %s306 = scalar_lea.sflag [#allocation12], %s305
        %s307 = sand.u32 %s185, 1
        %s308 = smul.addr %s307, 16
        %s309 = scalar_lea.vmem [#allocation11], %s308
        %s310 = smul.u32 2, %s35
        %s311 = smul.u32 2, %s35
        %s312 = smul.u32 2, %s35
        %s313 = smul.u32 2, %s35
        %s314 = smul.u32 2, %s35
        %v315 = vld [vmem:[%s268] sm:$0xff]
        %v316 = vld [vmem:[%s268 + $0x8] sm:$0xff]
        %v317 = vld [vmem:[%s268 + $0x10] sm:$0xff]
        %v318 = vld [vmem:[%s268 + $0x18] sm:$0xff]
        %v319 = vld [vmem:[%s268 + $0x20] sm:$0xff]
        %v320 = vld [vmem:[%s268 + $0x28] sm:$0xff]
        %v321 = vld [vmem:[%s268 + $0x30] sm:$0xff]
        %v322 = vld [vmem:[%s268 + $0x38] sm:$0xff]
        %v323 = vmul.f32 %v315, %v315
        %v324 = vmul.f32 %v316, %v316
        %v325 = vmul.f32 %v317, %v317
        %v326 = vmul.f32 %v318, %v318
        %v327 = vmul.f32 %v319, %v319
        %v328 = vmul.f32 %v320, %v320
        %v329 = vmul.f32 %v321, %v321
        %v330 = vmul.f32 %v322, %v322
        %v331 = vadd.f32 %v323, %v325
        %v332 = vadd.f32 %v331, %v327
        %v333 = vadd.f32 %v332, %v329
        %v334 = vrot.slane %v333, 4
        %v335 = vadd.f32 %v333, %v334
        %v336 = vrot.slane %v335, 2
        %v337 = vadd.f32 %v335, %v336
        %v338 = vrot.slane %v337, 1
        %v339 = vadd.f32 %v337, %v338
        %v340 = vadd.f32 %v324, %v326
        %v341 = vadd.f32 %v340, %v328
        %v342 = vadd.f32 %v341, %v330
        %v343 = vrot.slane %v342, 4
        %v344 = vadd.f32 %v342, %v343
        %v345 = vrot.slane %v344, 2
        %v346 = vadd.f32 %v344, %v345
        %v347 = vrot.slane %v346, 1
        %v348 = vadd.f32 %v346, %v347
        %v349 = vmax.f32 %v339, 1e-24
        %v350 = vmax.f32 %v348, 1e-24
        %v351 = vrsqrt.pop %v349
        %v352 = vrsqrt.pop %v350
        %v353 = vld [vmem:[#allocation2] sm:$0xff]
        %v354 = vld [vmem:[#allocation2 + $0x8] sm:$0xff]
        %v355 = vld [vmem:[#allocation2 + $0x10] sm:$0xff]
        %v356 = vld [vmem:[#allocation2 + $0x18] sm:$0xff]
        %vm357 = vcmask 261120
        %v359 = vsel %vm357, %v353, 0
        %v362 = vsel %vm357, %v354, 0
        %v365 = vsel %vm357, %v355, 0
        %v368 = vsel %vm357, %v356, 0
        %370 = vmatprep.subr.mxu0 0.0
        %371 = vmatpush1.msra.mxu0 0.0
        %372 = vmatprep.subr.mxu0 0.0
        %373 = vmatpush1.msra.mxu0 0.0
        %374 = vmatprep.subr.mxu0 0.0
        %375 = vmatpush1.msra.mxu0 0.0
        %376 = vmatprep.subr.mxu0 0.0
        %377 = vmatpush1.msra.mxu0 0.0
        %378 = vmatprep.subr.mxu0 0.0
        %379 = vmatpush1.msra.mxu0 0.0
        %380 = vmatprep.subr.mxu0 0.0
        %381 = vmatpush1.msra.mxu0 0.0
        %382 = vmatprep.subr.mxu0 0.0
        %383 = vmatpush1.msra.mxu0 0.0
        %384 = vmatprep.subr.mxu0 0.0
        %385 = vmatpush1.msra.mxu0 0.0
        %386 = vmatprep.subr.mxu0 0.0
        %387 = vmatpush1.msra.mxu0 0.0
        %388 = vmatprep.subr.mxu0 0.0
        %389 = vmatpush1.msra.mxu0 0.0
        %390 = vmatprep.subr.mxu0 0.0
        %391 = vmatpush1.msra.mxu0 0.0
        %392 = vmatprep.subr.mxu0 0.0
        %393 = vmatpush1.msra.mxu0 0.0
        %394 = vmatprep.subr.mxu0 %v322
        %395 = vmatpush1.msra.mxu0 %v321
        %396 = vmatprep.subr.mxu0 %v320
        %397 = vmatpush1.msra.mxu0 %v319
        %398 = vmatprep.subr.mxu0 %v318
        %399 = vmatpush1.msra.mxu0 %v317
        %400 = vmatprep.subr.mxu0 %v316
        %401 = vmatpush1.msra.mxu0 %v315
        %402 = vmatprep.subr.mxu0 0.0
        %403 = vmatpush2.msra.mxu0 0.0
        %404 = vmatprep.subr.mxu0 0.0
        %405 = vmatpush2.msra.mxu0 0.0
        %406 = vmatprep.subr.mxu0 0.0
        %407 = vmatpush2.msra.mxu0 0.0
        %408 = vmatprep.subr.mxu0 0.0
        %409 = vmatpush2.msra.mxu0 0.0
        %410 = vmatprep.subr.mxu0 0.0
        %411 = vmatpush2.msra.mxu0 0.0
        %412 = vmatprep.subr.mxu0 0.0
        %413 = vmatpush2.msra.mxu0 0.0
        %414 = vmatprep.subr.mxu0 0.0
        %415 = vmatpush2.msra.mxu0 0.0
        %416 = vmatprep.subr.mxu0 0.0
        %417 = vmatpush2.msra.mxu0 0.0
        %418 = vmatprep.subr.mxu0 0.0
        %419 = vmatpush2.msra.mxu0 0.0
        %420 = vmatprep.subr.mxu0 0.0
        %421 = vmatpush2.msra.mxu0 0.0
        %422 = vmatprep.subr.mxu0 0.0
        %423 = vmatpush2.msra.mxu0 0.0
        %424 = vmatprep.subr.mxu0 0.0
        %425 = vmatpush2.msra.mxu0 0.0
        %426 = vmatprep.subr.mxu0 0.0
        %427 = vmatpush2.msra.mxu0 0.0
        %428 = vmatprep.subr.mxu0 0.0
        %429 = vmatpush2.msra.mxu0 0.0
        %430 = vmatprep.subr.mxu0 0.0
        %431 = vmatpush2.msra.mxu0 0.0
        %432 = vmatprep.subr.mxu0 0.0
        %433 = vmatpush2.msra.mxu0 0.0
        %434 = vmatprep.mubr.f32.mxu0 0.0
        %435 = vmatmul.mubr.f32.gmra.mxu0 %v359
        %v436 = vpop.f32.mrf.mxu0
        %v437 = vadd.f32 0.0, %v436
        %v438 = vpop.f32.mrf.mxu0
        %v439 = vadd.f32 0.0, %v438
        %440 = vmatprep.mubr.f32.mxu0 0.0
        %441 = vmatmul.mubr.f32.gmra.mxu0 %v362
        %v442 = vpop.f32.mrf.mxu0
        %v443 = vadd.f32 0.0, %v442
        %v444 = vpop.f32.mrf.mxu0
        %v445 = vadd.f32 0.0, %v444
        %446 = vmatprep.mubr.f32.mxu0 0.0
        %447 = vmatmul.mubr.f32.gmra.mxu0 %v365
        %v448 = vpop.f32.mrf.mxu0
        %v449 = vadd.f32 0.0, %v448
        %v450 = vpop.f32.mrf.mxu0
        %v451 = vadd.f32 0.0, %v450
        %452 = vmatprep.mubr.f32.mxu0 0.0
        %453 = vmatmul.mubr.f32.gmra.mxu0 %v368
        %v454 = vpop.f32.mrf.mxu0
        %v455 = vadd.f32 0.0, %v454
        %v456 = vpop.f32.mrf.mxu0
        %v457 = vadd.f32 0.0, %v456
        %458 = vdwg.mxu0
        %v459 = vmul.f32 %v437, %v351
        %v460 = vmul.f32 %v439, %v352
        %v461 = vmul.f32 %v443, %v351
        %v462 = vmul.f32 %v445, %v352
        %v463 = vmul.f32 %v449, %v351
        %v464 = vmul.f32 %v451, %v352
        %v465 = vmul.f32 %v455, %v351
        %v466 = vmul.f32 %v457, %v352
        %467 = vst [vmem:[%s288] sm:$0xff] %v459
        %468 = vst [vmem:[%s288 + $0x8] sm:$0xff] %v460
        %469 = vst [vmem:[%s295] sm:$0xff] %v461
        %470 = vst [vmem:[%s295 + $0x8] sm:$0xff] %v462
        %471 = vst [vmem:[%s302] sm:$0xff] %v463
        %472 = vst [vmem:[%s302 + $0x8] sm:$0xff] %v464
        %473 = vst [vmem:[%s309] sm:$0xff] %v465
        %474 = vst [vmem:[%s309 + $0x8] sm:$0xff] %v466
        %s475 = sand.u32 %s101, 1
        %s476 = scalar_lea.sflag [#allocation4], %s475
        %s477 = sand.u32 %s101, 1
        %s478 = smul.addr %s477, 16
        %s479 = scalar_lea.vmem [#allocation7], %s478
        %s480 = sand.u32 %s30, 1
        %s481 = scalar_lea.sflag [#allocation9], %s480
        %s482 = sand.u32 %s129, 1
        %s483 = smul.addr %s482, 16
        %s484 = scalar_lea.vmem [#allocation8], %s483
        %s485 = sand.u32 %s30, 1
        %s486 = scalar_lea.sflag [#allocation9], %s485
        %s487 = sand.u32 %s157, 1
        %s488 = smul.addr %s487, 16
        %s489 = scalar_lea.vmem [#allocation10], %s488
        %s490 = sand.u32 %s185, 1
        %s491 = scalar_lea.sflag [#allocation12], %s490
        %s492 = sand.u32 %s185, 1
        %s493 = smul.addr %s492, 16
        %s494 = scalar_lea.vmem [#allocation11], %s493
        // Predicated region
        $region37: #{_prediction_scores.1} parent=27 // pred_check
          %p495 = pneg %p111
        $region38: #{_prediction_scores.1} parent=27 // pred_check_branch
          %497 = sbr.rel (%p495) target = $region40
        $region39: #{_prediction_scores.1} parent=27 // pred_region
          %s498 = smul.u32 2, %s35
          %s500 = ssub.s32 256, 256
          %501 = vsyncadd %s476, %s500
          %s502 = smul.addr %s34, 2
          %s503 = sadd.s32 %s498, %s502
          %s504 = smul.addr %s503, 128
          %s505 = scalar_lea.hbm %s2, %s504
          %s507 = sshll.u32 %s479, 4
          %s508 = int_to_ptr.vmem [resolvable:$true] %s507
          %510 = dma.vmem_to_hbm [thread:$0]  %s508, 256, %s505, %s476
        $region40: #{_prediction_scores.1} parent=27 // pred_fallthru
          _
        // Predicated region
        $region41: #{_prediction_scores.1} parent=27 // pred_check
          %p511 = pneg %p139
        $region42: #{_prediction_scores.1} parent=27 // pred_check_branch
          %513 = sbr.rel (%p511) target = $region44
        $region43: #{_prediction_scores.1} parent=27 // pred_region
          %s514 = smul.u32 2, %s35
          %s516 = ssub.s32 256, 256
          %517 = vsyncadd %s481, %s516
          %s518 = smul.addr %s34, 2
          %s519 = sadd.s32 %s514, %s518
          %s520 = smul.addr %s519, 128
          %s521 = scalar_lea.hbm %s3, %s520
          %s523 = sshll.u32 %s484, 4
          %s524 = int_to_ptr.vmem [resolvable:$true] %s523
          %526 = dma.vmem_to_hbm [thread:$0]  %s524, 256, %s521, %s481
        $region44: #{_prediction_scores.1} parent=27 // pred_fallthru
          _
        // Predicated region
        $region45: #{_prediction_scores.1} parent=27 // pred_check
          %p527 = pneg %p167
        $region46: #{_prediction_scores.1} parent=27 // pred_check_branch
          %529 = sbr.rel (%p527) target = $region48
        $region47: #{_prediction_scores.1} parent=27 // pred_region
          %s530 = smul.u32 2, %s35
          %s532 = ssub.s32 256, 256
          %533 = vsyncadd %s486, %s532
          %s534 = smul.addr %s34, 2
          %s535 = sadd.s32 %s530, %s534
          %s536 = smul.addr %s535, 128
          %s537 = scalar_lea.hbm %s4, %s536
          %s539 = sshll.u32 %s489, 4
          %s540 = int_to_ptr.vmem [resolvable:$true] %s539
          %542 = dma.vmem_to_hbm [thread:$0]  %s540, 256, %s537, %s486
        $region48: #{_prediction_scores.1} parent=27 // pred_fallthru
          _
        // Predicated region
        $region49: #{_prediction_scores.1} parent=27 // pred_check
          %p543 = pneg %p195
        $region50: #{_prediction_scores.1} parent=27 // pred_check_branch
          %545 = sbr.rel (%p543) target = $region52
        $region51: #{_prediction_scores.1} parent=27 // pred_region
          %s546 = smul.u32 2, %s35
          %s548 = ssub.s32 256, 256
          %549 = vsyncadd %s491, %s548
          %s550 = smul.addr %s34, 2
          %s551 = sadd.s32 %s546, %s550
          %s552 = smul.addr %s551, 128
          %s553 = scalar_lea.hbm %s5, %s552
          %s555 = sshll.u32 %s494, 4
          %s556 = int_to_ptr.vmem [resolvable:$true] %s555
          %558 = dma.vmem_to_hbm [thread:$0]  %s556, 256, %s553, %s491
        $region52: #{_prediction_scores.1} parent=27 // pred_fallthru
          _
      $region28: #{_prediction_scores.1} parent=5 // pred_fallthru
        _
      %p559 = scmp.le.s32.totalorder 2, %s25
      // Predicated region
      $region53: #{_prediction_scores.1} parent=5 // pred_check
        %p560 = pneg %p559
      $region54: #{_prediction_scores.1} parent=5 // pred_check_branch
        %562 = sbr.rel (%p560) target = $region56
      $region55: #{_prediction_scores.1} parent=5 // pred_region
        %s563 = ssub.s32 %s25, 2
        // Predicated region
        $region57: #{_prediction_scores.1} parent=55 // pred_check
          %p564 = pneg %p117
        $region58: #{_prediction_scores.1} parent=55 // pred_check_branch
          %566 = sbr.rel (%p564) target = $region60
        $region59: #{_prediction_scores.1} parent=55 // pred_region
          %s567 = sand.u32 %s102, 1
          %s568 = scalar_lea.sflag [#allocation4], %s567
          %s569 = sand.u32 %s102, 1
          %s570 = smul.addr %s569, 16
          %s571 = scalar_lea.vmem [#allocation7], %s570
          %572 = dma.done %s568, 256
        $region60: #{_prediction_scores.1} parent=55 // pred_fallthru
          _
        // Predicated region
        $region61: #{_prediction_scores.1} parent=55 // pred_check
          %p573 = pneg %p145
        $region62: #{_prediction_scores.1} parent=55 // pred_check_branch
          %575 = sbr.rel (%p573) target = $region64
        $region63: #{_prediction_scores.1} parent=55 // pred_region
          %s576 = sand.u32 %s31, 1
          %s577 = scalar_lea.sflag [#allocation9], %s576
          %s578 = sand.u32 %s130, 1
          %s579 = smul.addr %s578, 16
          %s580 = scalar_lea.vmem [#allocation8], %s579
          %581 = dma.done %s577, 256
        $region64: #{_prediction_scores.1} parent=55 // pred_fallthru
          _
        // Predicated region
        $region65: #{_prediction_scores.1} parent=55 // pred_check
          %p582 = pneg %p173
        $region66: #{_prediction_scores.1} parent=55 // pred_check_branch
          %584 = sbr.rel (%p582) target = $region68
        $region67: #{_prediction_scores.1} parent=55 // pred_region
          %s585 = sand.u32 %s31, 1
          %s586 = scalar_lea.sflag [#allocation9], %s585
          %s587 = sand.u32 %s158, 1
          %s588 = smul.addr %s587, 16
          %s589 = scalar_lea.vmem [#allocation10], %s588
          %590 = dma.done %s586, 256
        $region68: #{_prediction_scores.1} parent=55 // pred_fallthru
          _
        // Predicated region
        $region69: #{_prediction_scores.1} parent=55 // pred_check
          %p591 = pneg %p201
        $region70: #{_prediction_scores.1} parent=55 // pred_check_branch
          %593 = sbr.rel (%p591) target = $region72
        $region71: #{_prediction_scores.1} parent=55 // pred_region
          %s594 = sand.u32 %s186, 1
          %s595 = scalar_lea.sflag [#allocation12], %s594
          %s596 = sand.u32 %s186, 1
          %s597 = smul.addr %s596, 16
          %s598 = scalar_lea.vmem [#allocation11], %s597
          %599 = dma.done %s595, 256
        $region72: #{_prediction_scores.1} parent=55 // pred_fallthru
          _
      $region56: #{_prediction_scores.1} parent=5 // pred_fallthru
        _
    $region6: #{_prediction_scores.1} parent=1 // loop_footer
      %s29 = sadd.s32 1, %s25
    $region7: #{_prediction_scores.1} parent=1 // loop_footer_branch
      %24 = sbr.rel target = $region3
    $region8: #{_prediction_scores.1} parent=1 // loop_exit
      _
    %600 = vsyncpa [#allocation3], 1
    %s601 = scalar_lea.sflag [#allocation3], 1
    %602 = vsyncpa %s601, 1
    %603 = vsyncpa [#allocation6], 1
    %s604 = scalar_lea.sflag [#allocation6], 1
    %605 = vsyncpa %s604, 1
    %606 = vsyncpa [#allocation4], 1
    %s607 = scalar_lea.sflag [#allocation4], 1
    %608 = vsyncpa %s607, 1
    %609 = vsyncpa [#allocation9], 1
    %s610 = scalar_lea.sflag [#allocation9], 1
    %611 = vsyncpa %s610, 1
    %612 = vsyncpa [#allocation12], 1
    %s613 = scalar_lea.sflag [#allocation12], 1
    %614 = vsyncpa %s613, 1

</llo_original>
